<compile_context>
chip_gen: v6e
topology: v6e:2x2x1
jax: 0.10.0
libtpu: 0.0.40
codegen_flags: <defaults>
</compile_context>

<pallas_src>
import functools

import jax
import jax.numpy as jnp
import numpy as np
from jax.experimental import pallas as pl
from jax.experimental.pallas import tpu as pltpu

EPS = 1e-5  # PyTorch LayerNorm default
VMEM_BUDGET_BYTES = 28 * 1024 * 1024  # conservative: fits v7x's 32 MiB scoped default


def _round_up(x, m):
    return ((x + m - 1) // m) * m


def _cdiv(a, b):
    return -(-a // b)


def _vmem_estimate_bytes(tm_f, Ms, Ks, S):
    """Conservative VMEM estimate for the gather kernel (double-buffered blocks + temps)."""
    lane = lambda d: _round_up(max(d, 1), 128)
    sub = lambda d: _round_up(max(d, 1), 8)
    dbl = lambda r, c: 2 * sub(r) * lane(c) * 4
    total = dbl(S, tm_f)            # index slab block
    total += dbl(Ks, Ms)            # stacked table (constant-index block)
    total += dbl(tm_f, Ms)          # output block
    total += 3 * sub(tm_f) * lane(max(Ks, Ms)) * 4   # in-kernel one-hot + matmul result temps
    return total


# --------------------------------------------------------------------------
# Stage 1: one-shot position-wise transform of the embedding table.
#   table2 = ReLU(LN2(ReLU(LN1(emb)) @ W + b))            (r_pos, M)
# Output is the lane-stacked gather table:
#   t_stack[f*r_pos + p, f*M:(f+1)*M] = table2[p], zeros elsewhere.
# --------------------------------------------------------------------------
def _table_kernel(tab_ref, p_ref, w_ref, o_ref, *, E, M, r_pos, fold):
    x = tab_ref[...].astype(jnp.float32)                  # (r_pos, E)

    g1 = p_ref[0:1, :E]
    b1 = p_ref[1:2, :E]
    bias = p_ref[2:3, :M]
    g2 = p_ref[3:4, :M]
    b2 = p_ref[4:5, :M]

    # LayerNorm(E) + ReLU — two-pass variance (no catastrophic cancellation).
    mu = jnp.mean(x, axis=-1, keepdims=True)
    xc = x - mu
    var = jnp.mean(xc * xc, axis=-1, keepdims=True)
    h = xc * jax.lax.rsqrt(var + EPS) * g1 + b1
    h = jnp.maximum(h, 0.0)

    # PositionFeedForward (rank=None): 1x1 Conv1d == dense E->M matmul.
    y = jnp.dot(h, w_ref[...].astype(jnp.float32),
                preferred_element_type=jnp.float32) + bias  # (r_pos, M)

    # LayerNorm(M) + ReLU.
    mu2 = jnp.mean(y, axis=-1, keepdims=True)
    yc = y - mu2
    var2 = jnp.mean(yc * yc, axis=-1, keepdims=True)
    z = jnp.maximum(yc * jax.lax.rsqrt(var2 + EPS) * g2 + b2, 0.0)  # (r_pos, M)

    o_ref[...] = jnp.zeros_like(o_ref)
    for f in range(fold):  # static, tiny
        o_ref[f * r_pos:(f + 1) * r_pos, f * M:(f + 1) * M] = z.astype(o_ref.dtype)


# --------------------------------------------------------------------------
# Stage 2: the hot loop — pure gather of the stacked table.
#   sidx_ref : (S, tm) int32, rows [0, fold) hold idx[r*fold+f] + f*r_pos
#   tstack   : (fold*r_pos, fold*M) float32 (VMEM-resident)
#   o_ref    : (tm, fold*M) — fully lane-dense stores
# --------------------------------------------------------------------------
def _gather_kernel(sidx_ref, tstack_ref, o_ref, *, k_stack, fold):
    tm_f = o_ref.shape[0]

    # Indices arrive lane-dense; cast to f32 (exact for small ints) and move the
    # tiny (S, tm) block to row orientation with one small XLU transpose.
    idx_rows = jnp.transpose(sidx_ref[...].astype(jnp.float32))   # (tm_f, S)

    k_iota = jax.lax.broadcasted_iota(
        jnp.int32, (tm_f, k_stack), 1).astype(jnp.float32)        # (tm_f, Ks)
    cmp = (k_iota == idx_rows[:, 0:1])
    for f in range(1, fold):  # static, tiny
        cmp = jnp.logical_or(cmp, k_iota == idx_rows[:, f:f + 1])
    onehot = cmp.astype(jnp.float32)                              # (tm_f, Ks)

    # Exact row selection: one-hot @ stacked table (MXU; extended slot).
    out = jnp.dot(onehot, tstack_ref[...], preferred_element_type=jnp.float32)
    o_ref[...] = out.astype(o_ref.dtype)


@functools.partial(jax.jit, static_argnames=("tm",))
def nano_region_embedder(pos_seq, params, *, tm=4096):
    """pos_seq: (B, L) int32 indices. Returns (B, L, r_model) float32.

    `tm` = folded output rows per grid step (each folded row packs `fold`
    logical rows into 128 lanes)."""
    emb = params["embedding"]                             # (r_pos, E)
    g1, b1 = params["ln1_gamma"], params["ln1_beta"]      # (E,)
    w_t, bias = params["ffn_w_t"], params["ffn_b"]        # (E, M), (M,)
    g2, b2 = params["ln2_gamma"], params["ln2_beta"]      # (M,)

    B, L = pos_seq.shape
    r_pos, E = emb.shape
    M = w_t.shape[1]
    N = B * L

    # Lane-folding factor: pack `fold` logical rows per 128-lane output row.
    fold = 128 // M if (M < 128 and 128 % M == 0) else 1
    # TODO(synk): when M does not divide 128 the output stays (rows, M) and
    # stores are lane-masked (fold=1 path); a folded layout for those M is not
    # implemented.
    Ms = fold * M
    Ks = fold * r_pos

    # ---- packed small params (single slab -> single DMA into stage 1) ----
    P = max(E, M)
    slab = jnp.zeros((5, P), jnp.float32)
    slab = slab.at[0, :E].set(g1.astype(jnp.float32))
    slab = slab.at[1, :E].set(b1.astype(jnp.float32))
    slab = slab.at[2, :M].set(bias.astype(jnp.float32))
    slab = slab.at[3, :M].set(g2.astype(jnp.float32))
    slab = slab.at[4, :M].set(b2.astype(jnp.float32))

    # ---- Stage 1: one-shot table transform (all LN/ReLU/matmul hoisted) ----
    t_stack = pl.pallas_call(
        functools.partial(_table_kernel, E=E, M=M, r_pos=r_pos, fold=fold),
        out_shape=jax.ShapeDtypeStruct((Ks, Ms), jnp.float32),
        grid_spec=pltpu.PrefetchScalarGridSpec(
            num_scalar_prefetch=0,
            grid=(1,),
            in_specs=[
                pl.BlockSpec((r_pos, E), lambda i: (0, 0)),   # embedding table
                pl.BlockSpec((5, P), lambda i: (0, 0)),       # packed LN/bias params
                pl.BlockSpec((E, M), lambda i: (0, 0)),       # W^T
            ],
            out_specs=pl.BlockSpec((Ks, Ms), lambda i: (0, 0)),
        ),
        compiler_params=pltpu.CompilerParams(dimension_semantics=("arbitrary",)),
    )(emb.astype(jnp.float32), slab, w_t.astype(jnp.float32))

    # ---- Stage 2 tiling ----
    n_fold = _cdiv(N, fold)                       # folded rows needed
    tm_eff = max(8, min(int(tm), _round_up(n_fold, 8)))
    tm_eff = _round_up(tm_eff, 8)
    # Give both v7x TensorCores work when the problem is big enough.
    if n_fold > 2048 and _cdiv(n_fold, tm_eff) < 2:
        tm_eff = _round_up(_cdiv(n_fold, 2), 8)
    grid_rows = _cdiv(n_fold, tm_eff)
    n_fold_pad = grid_rows * tm_eff
    n_rows_pad = n_fold_pad * fold
    S = _round_up(fold, 8)                        # sublane-padded index rows

    est = _vmem_estimate_bytes(tm_eff, Ms, Ks, S)
    if est > VMEM_BUDGET_BYTES:
        raise ValueError(
            f"VMEM estimate {est} B exceeds budget {VMEM_BUDGET_BYTES} B; lower tm.")

    # ---- lane-dense index slab: sidx[f, r] = idx[r*fold + f] + f*r_pos ----
    idx = pos_seq.reshape(-1).astype(jnp.int32)
    if n_rows_pad != N:
        # Pad rows reuse index 0; their outputs are sliced off below.
        idx = jnp.pad(idx, (0, n_rows_pad - N))
    sidx = jnp.swapaxes(idx.reshape(n_fold_pad, fold), 0, 1)         # (fold, n_fold_pad)
    sidx = sidx + (jnp.arange(fold, dtype=jnp.int32) * r_pos)[:, None]
    if S != fold:
        sidx = jnp.concatenate(
            [sidx, jnp.zeros((S - fold, n_fold_pad), jnp.int32)], axis=0)

    # ---- Stage 2: pure gather, lane-dense input and output ----
    out_f = pl.pallas_call(
        functools.partial(_gather_kernel, k_stack=Ks, fold=fold),
        out_shape=jax.ShapeDtypeStruct((n_fold_pad, Ms), jnp.float32),
        grid_spec=pltpu.PrefetchScalarGridSpec(
            num_scalar_prefetch=0,
            grid=(grid_rows,),
            in_specs=[
                pl.BlockSpec((S, tm_eff), lambda i: (0, i)),   # lane-dense indices
                pl.BlockSpec((Ks, Ms), lambda i: (0, 0)),      # stacked table (resident)
            ],
            out_specs=pl.BlockSpec((tm_eff, Ms), lambda i: (i, 0)),
        ),
        compiler_params=pltpu.CompilerParams(dimension_semantics=("parallel",)),
    )(sidx, t_stack)

    # Un-fold: contiguous row-major reshape (free); slice only if padding existed.
    out = out_f.reshape(n_rows_pad, M)
    if n_rows_pad != N:
        out = out[:N]
    return out.reshape(B, L, M)


def _reference(pos_seq, params):
    """Pure-JAX reference mirroring the PyTorch module."""
    x = params["embedding"][pos_seq]                                   # (B,L,E)

    def ln(v, g, b):
        mu = jnp.mean(v, axis=-1, keepdims=True)
        var = jnp.mean((v - mu) ** 2, axis=-1, keepdims=True)
        return (v - mu) / jnp.sqrt(var + EPS) * g + b

    h = jnp.maximum(ln(x, params["ln1_gamma"], params["ln1_beta"]), 0.0)
    y = h @ params["ffn_w_t"] + params["ffn_b"]
    z = jnp.maximum(ln(y, params["ln2_gamma"], params["ln2_beta"]), 0.0)
    return z


def make_params(key, r_pos, r_embedding, r_model):
    k_emb, k_w, k_b, k_g1, k_b1, k_g2, k_b2 = jax.random.split(key, 7)
    # nn.Embedding default init: N(0, 1)
    embedding = jax.random.normal(k_emb, (r_pos, r_embedding), jnp.float32)
    # Conv1d(kernel=1) weight (M, E, 1) ~ U(-k, k), k = 1/sqrt(E); stored transposed (E, M).
    lim = 1.0 / np.sqrt(r_embedding)
    w = jax.random.uniform(k_w, (r_model, r_embedding), jnp.float32, -lim, lim)
    b = jax.random.uniform(k_b, (r_model,), jnp.float32, -lim, lim)
    # LayerNorm affine params (non-trivial values for a meaningful test).
    ln1_gamma = 1.0 + 0.1 * jax.random.normal(k_g1, (r_embedding,), jnp.float32)
    ln1_beta = 0.1 * jax.random.normal(k_b1, (r_embedding,), jnp.float32)
    ln2_gamma = 1.0 + 0.1 * jax.random.normal(k_g2, (r_model,), jnp.float32)
    ln2_beta = 0.1 * jax.random.normal(k_b2, (r_model,), jnp.float32)
    return {
        "embedding": embedding,
        "ln1_gamma": ln1_gamma, "ln1_beta": ln1_beta,
        "ffn_w_t": w.T, "ffn_b": b,
        "ln2_gamma": ln2_gamma, "ln2_beta": ln2_beta,
    }


if __name__ == "__main__":
    r_pos, r_embedding, r_model = 16, 32, 64
    B, L = 2, 8

    key = jax.random.PRNGKey(0)
    k_params, k_seq = jax.random.split(key)
    params = make_params(k_params, r_pos, r_embedding, r_model)
    pos_seq = jax.random.randint(k_seq, (B, L), 0, r_pos, dtype=jnp.int32)

    out = nano_region_embedder(pos_seq, params)          # default tm=4096 (clamped)
    out = jax.block_until_ready(out)

    ref = _reference(pos_seq, params)
    np.testing.assert_allclose(np.asarray(out), np.asarray(ref), rtol=1e-5, atol=3e-5)

    print("KERNEL_OK")
</pallas_src>

<mosaic_0001>
module attributes {stable_mosaic.version = 11 : i64} {
  func.func @_table_kernel(%arg0: i32, %arg1: memref<16x32xf32, #tpu.memory_space<vmem>>, %arg2: memref<5x64xf32, #tpu.memory_space<vmem>>, %arg3: memref<32x64xf32, #tpu.memory_space<vmem>>, %arg4: memref<32x128xf32, #tpu.memory_space<vmem>>) attributes {dimension_semantics = [#tpu.dimension_semantics<arbitrary>], iteration_bounds = array<i64: 1>, scalar_prefetch = 0 : i64, scratch_operands = 0 : i64, tpu.core_type = #tpu.core_type<tc>, window_params = [{pipeline_mode = #tpu.pipeline_mode<synchronous>, transform_indices = @transform_0, window_bounds = array<i64: 16, 32>}, {pipeline_mode = #tpu.pipeline_mode<synchronous>, transform_indices = @transform_1, window_bounds = array<i64: 5, 64>}, {pipeline_mode = #tpu.pipeline_mode<synchronous>, transform_indices = @transform_2, window_bounds = array<i64: 32, 64>}, {pipeline_mode = #tpu.pipeline_mode<synchronous>, transform_indices = @transform_3, window_bounds = array<i64: 32, 128>}]} {
    %c0 = arith.constant 0 : index
    %c0_0 = arith.constant 0 : index
    %0 = vector.load %arg1[%c0, %c0_0] : memref<16x32xf32, #tpu.memory_space<vmem>>, vector<16x32xf32>
    %c0_1 = arith.constant 0 : index
    %c0_2 = arith.constant 0 : index
    %1 = vector.load %arg2[%c0_1, %c0_2] : memref<5x64xf32, #tpu.memory_space<vmem>>, vector<1x32xf32>
    %c1 = arith.constant 1 : index
    %c0_3 = arith.constant 0 : index
    %2 = vector.load %arg2[%c1, %c0_3] : memref<5x64xf32, #tpu.memory_space<vmem>>, vector<1x32xf32>
    %c2 = arith.constant 2 : index
    %c0_4 = arith.constant 0 : index
    %3 = vector.load %arg2[%c2, %c0_4] : memref<5x64xf32, #tpu.memory_space<vmem>>, vector<1x64xf32>
    %c3 = arith.constant 3 : index
    %c0_5 = arith.constant 0 : index
    %4 = vector.load %arg2[%c3, %c0_5] : memref<5x64xf32, #tpu.memory_space<vmem>>, vector<1x64xf32>
    %c4 = arith.constant 4 : index
    %c0_6 = arith.constant 0 : index
    %5 = vector.load %arg2[%c4, %c0_6] : memref<5x64xf32, #tpu.memory_space<vmem>>, vector<1x64xf32>
    %cst = arith.constant dense<0.000000e+00> : vector<16xf32>
    %6 = vector.multi_reduction <add>, %0, %cst [1] : vector<16x32xf32> to vector<16xf32>
    %7 = vector.shape_cast %6 : vector<16xf32> to vector<16x1xf32>
    %cst_7 = arith.constant 3.200000e+01 : f32
    %8 = vector.broadcast %cst_7 : f32 to vector<16x1xf32>
    %9 = arith.divf %7, %8 : vector<16x1xf32>
    %10 = vector.broadcast %9 : vector<16x1xf32> to vector<16x32xf32>
    %11 = arith.subf %0, %10 : vector<16x32xf32>
    %12 = arith.mulf %11, %11 : vector<16x32xf32>
    %cst_8 = arith.constant dense<0.000000e+00> : vector<16xf32>
    %13 = vector.multi_reduction <add>, %12, %cst_8 [1] : vector<16x32xf32> to vector<16xf32>
    %14 = vector.shape_cast %13 : vector<16xf32> to vector<16x1xf32>
    %cst_9 = arith.constant 3.200000e+01 : f32
    %15 = vector.broadcast %cst_9 : f32 to vector<16x1xf32>
    %16 = arith.divf %14, %15 : vector<16x1xf32>
    %cst_10 = arith.constant 9.99999974E-6 : f32
    %17 = vector.broadcast %cst_10 : f32 to vector<16x1xf32>
    %18 = arith.addf %16, %17 : vector<16x1xf32>
    %19 = math.rsqrt %18 : vector<16x1xf32>
    %20 = vector.broadcast %19 : vector<16x1xf32> to vector<16x32xf32>
    %21 = arith.mulf %11, %20 : vector<16x32xf32>
    %22 = vector.broadcast %1 : vector<1x32xf32> to vector<16x32xf32>
    %23 = arith.mulf %21, %22 : vector<16x32xf32>
    %24 = vector.broadcast %2 : vector<1x32xf32> to vector<16x32xf32>
    %25 = arith.addf %23, %24 : vector<16x32xf32>
    %cst_11 = arith.constant 0.000000e+00 : f32
    %26 = vector.broadcast %cst_11 : f32 to vector<16x32xf32>
    %27 = arith.maximumf %25, %26 : vector<16x32xf32>
    %c0_12 = arith.constant 0 : index
    %c0_13 = arith.constant 0 : index
    %28 = vector.load %arg3[%c0_12, %c0_13] : memref<32x64xf32, #tpu.memory_space<vmem>>, vector<32x64xf32>
    %cst_14 = arith.constant dense<0.000000e+00> : vector<16x64xf32>
    %29 = tpu.matmul %27, %28, %cst_14 {dimension_numbers = #tpu.dot_dimension_numbers<[1], [0], [0], [1], [0, 0, 1, 1], [], []>} : vector<16x32xf32>, vector<32x64xf32>, vector<16x64xf32> -> vector<16x64xf32>
    %30 = vector.broadcast %3 : vector<1x64xf32> to vector<16x64xf32>
    %31 = arith.addf %29, %30 : vector<16x64xf32>
    %cst_15 = arith.constant dense<0.000000e+00> : vector<16xf32>
    %32 = vector.multi_reduction <add>, %31, %cst_15 [1] : vector<16x64xf32> to vector<16xf32>
    %33 = vector.shape_cast %32 : vector<16xf32> to vector<16x1xf32>
    %cst_16 = arith.constant 6.400000e+01 : f32
    %34 = vector.broadcast %cst_16 : f32 to vector<16x1xf32>
    %35 = arith.divf %33, %34 : vector<16x1xf32>
    %36 = vector.broadcast %35 : vector<16x1xf32> to vector<16x64xf32>
    %37 = arith.subf %31, %36 : vector<16x64xf32>
    %38 = arith.mulf %37, %37 : vector<16x64xf32>
    %cst_17 = arith.constant dense<0.000000e+00> : vector<16xf32>
    %39 = vector.multi_reduction <add>, %38, %cst_17 [1] : vector<16x64xf32> to vector<16xf32>
    %40 = vector.shape_cast %39 : vector<16xf32> to vector<16x1xf32>
    %cst_18 = arith.constant 6.400000e+01 : f32
    %41 = vector.broadcast %cst_18 : f32 to vector<16x1xf32>
    %42 = arith.divf %40, %41 : vector<16x1xf32>
    %cst_19 = arith.constant 9.99999974E-6 : f32
    %43 = vector.broadcast %cst_19 : f32 to vector<16x1xf32>
    %44 = arith.addf %42, %43 : vector<16x1xf32>
    %45 = math.rsqrt %44 : vector<16x1xf32>
    %46 = vector.broadcast %45 : vector<16x1xf32> to vector<16x64xf32>
    %47 = arith.mulf %37, %46 : vector<16x64xf32>
    %48 = vector.broadcast %4 : vector<1x64xf32> to vector<16x64xf32>
    %49 = arith.mulf %47, %48 : vector<16x64xf32>
    %50 = vector.broadcast %5 : vector<1x64xf32> to vector<16x64xf32>
    %51 = arith.addf %49, %50 : vector<16x64xf32>
    %cst_20 = arith.constant 0.000000e+00 : f32
    %52 = vector.broadcast %cst_20 : f32 to vector<16x64xf32>
    %53 = arith.maximumf %51, %52 : vector<16x64xf32>
    %cst_21 = arith.constant 0.000000e+00 : f32
    %54 = vector.broadcast %cst_21 : f32 to vector<32x128xf32>
    %c0_22 = arith.constant 0 : index
    %c0_23 = arith.constant 0 : index
    %55 = vector.load %arg4[%c0_22, %c0_23] : memref<32x128xf32, #tpu.memory_space<vmem>>, vector<32x128xf32>
    tpu.vector_store %arg4[%c0_22, %c0_23], %54 {strides = array<i32>} : memref<32x128xf32, #tpu.memory_space<vmem>>, vector<32x128xf32>,
    %c0_24 = arith.constant 0 : index
    %c0_25 = arith.constant 0 : index
    %56 = vector.load %arg4[%c0_24, %c0_25] : memref<32x128xf32, #tpu.memory_space<vmem>>, vector<16x64xf32>
    tpu.vector_store %arg4[%c0_24, %c0_25], %53 {strides = array<i32>} : memref<32x128xf32, #tpu.memory_space<vmem>>, vector<16x64xf32>,
    %c16 = arith.constant 16 : index
    %c64 = arith.constant 64 : index
    %57 = vector.load %arg4[%c16, %c64] : memref<32x128xf32, #tpu.memory_space<vmem>>, vector<16x64xf32>
    tpu.vector_store %arg4[%c16, %c64], %53 {strides = array<i32>} : memref<32x128xf32, #tpu.memory_space<vmem>>, vector<16x64xf32>,
    return
  }
  func.func @transform_0(%arg0: i32) -> (i32, i32) {
    %c0_i32 = arith.constant 0 : i32
    %c0_i32_0 = arith.constant 0 : i32
    %c0_i32_1 = arith.constant 0 : i32
    return %c0_i32, %c0_i32_0 : i32, i32
  }
  func.func @transform_1(%arg0: i32) -> (i32, i32) {
    %c0_i32 = arith.constant 0 : i32
    %c0_i32_0 = arith.constant 0 : i32
    %c0_i32_1 = arith.constant 0 : i32
    return %c0_i32, %c0_i32_0 : i32, i32
  }
  func.func @transform_2(%arg0: i32) -> (i32, i32) {
    %c0_i32 = arith.constant 0 : i32
    %c0_i32_0 = arith.constant 0 : i32
    %c0_i32_1 = arith.constant 0 : i32
    return %c0_i32, %c0_i32_0 : i32, i32
  }
  func.func @transform_3(%arg0: i32) -> (i32, i32) {
    %c0_i32 = arith.constant 0 : i32
    %c0_i32_0 = arith.constant 0 : i32
    %c0_i32_1 = arith.constant 0 : i32
    return %c0_i32, %c0_i32_0 : i32, i32
  }
}

module attributes {stable_mosaic.version = 11 : i64} {
  func.func @_gather_kernel(%arg0: i32, %arg1: memref<8x8xi32, #tpu.memory_space<vmem>>, %arg2: memref<32x128xf32, #tpu.memory_space<vmem>>, %arg3: memref<8x128xf32, #tpu.memory_space<vmem>>) attributes {dimension_semantics = [#tpu.dimension_semantics<parallel>], iteration_bounds = array<i64: 1>, scalar_prefetch = 0 : i64, scratch_operands = 0 : i64, tpu.core_type = #tpu.core_type<tc>, window_params = [{transform_indices = @transform_0, window_bounds = array<i64: 8, 8>}, {pipeline_mode = #tpu.pipeline_mode<synchronous>, transform_indices = @transform_1, window_bounds = array<i64: 32, 128>}, {transform_indices = @transform_2, window_bounds = array<i64: 8, 128>}]} {
    %c0 = arith.constant 0 : index
    %c0_0 = arith.constant 0 : index
    %0 = vector.load %arg1[%c0, %c0_0] : memref<8x8xi32, #tpu.memory_space<vmem>>, vector<8x8xi32>
    %1 = arith.sitofp %0 : vector<8x8xi32> to vector<8x8xf32>
    %2 = tpu.transpose %1, [1, 0] : vector<8x8xf32> -> vector<8x8xf32>
    %3 = tpu.iota {dimensions = array<i32: 1>} : vector<8x32xi32>
    %4 = arith.sitofp %3 : vector<8x32xi32> to vector<8x32xf32>
    %5 = vector.extract_strided_slice %2 {offsets = [0, 0], sizes = [8, 1], strides = [1, 1]} : vector<8x8xf32> to vector<8x1xf32>
    %6 = vector.broadcast %5 : vector<8x1xf32> to vector<8x32xf32>
    %7 = arith.cmpf oeq, %4, %6 : vector<8x32xf32>
    %8 = vector.extract_strided_slice %2 {offsets = [0, 1], sizes = [8, 1], strides = [1, 1]} : vector<8x8xf32> to vector<8x1xf32>
    %9 = vector.broadcast %8 : vector<8x1xf32> to vector<8x32xf32>
    %10 = arith.cmpf oeq, %4, %9 : vector<8x32xf32>
    %11 = arith.ori %7, %10 : vector<8x32xi1>
    %12 = arith.extui %11 : vector<8x32xi1> to vector<8x32xi32>
    %13 = arith.sitofp %12 : vector<8x32xi32> to vector<8x32xf32>
    %c0_1 = arith.constant 0 : index
    %c0_2 = arith.constant 0 : index
    %14 = vector.load %arg2[%c0_1, %c0_2] : memref<32x128xf32, #tpu.memory_space<vmem>>, vector<32x128xf32>
    %cst = arith.constant dense<0.000000e+00> : vector<8x128xf32>
    %15 = tpu.matmul %13, %14, %cst {dimension_numbers = #tpu.dot_dimension_numbers<[1], [0], [0], [1], [0, 0, 1, 1], [], []>} : vector<8x32xf32>, vector<32x128xf32>, vector<8x128xf32> -> vector<8x128xf32>
    %c0_3 = arith.constant 0 : index
    %c0_4 = arith.constant 0 : index
    %16 = vector.load %arg3[%c0_3, %c0_4] : memref<8x128xf32, #tpu.memory_space<vmem>>, vector<8x128xf32>
    tpu.vector_store %arg3[%c0_3, %c0_4], %15 {strides = array<i32>} : memref<8x128xf32, #tpu.memory_space<vmem>>, vector<8x128xf32>,
    return
  }
  func.func @transform_0(%arg0: i32) -> (i32, i32) {
    %c0_i32 = arith.constant 0 : i32
    %c0_i32_0 = arith.constant 0 : i32
    return %c0_i32, %arg0 : i32, i32
  }
  func.func @transform_1(%arg0: i32) -> (i32, i32) {
    %c0_i32 = arith.constant 0 : i32
    %c0_i32_0 = arith.constant 0 : i32
    %c0_i32_1 = arith.constant 0 : i32
    return %c0_i32, %c0_i32_0 : i32, i32
  }
  func.func @transform_2(%arg0: i32) -> (i32, i32) {
    %c0_i32 = arith.constant 0 : i32
    %c0_i32_0 = arith.constant 0 : i32
    return %arg0, %c0_i32 : i32, i32
  }
}

</mosaic_0001>

<llo_original>
// kernel: nano_region_embedder.3
$region0: #{nano_region_embedder.3}
  #allocation0 [shape = 'u32[]', space=smem, size = 0x4, offset = 0x4, fixed_abs, tag = 'smem constant byte address 0x4 - core index']
  #allocation1 [shape = 'u32[144,128]{1,0:T(1,128)}', space=vmem, size = 0x12000, scoped, tag = 'internal scratch']
  %s0 = inlined_call_operand.vmem [shape: s32[8,8], index: 0, kind: input, shape index: {}]
  %s1 = inlined_call_operand.vmem [shape: f32[32,128], index: 1, kind: input, shape index: {}]
  %s2 = inlined_call_operand.vmem [shape: f32[8,128], index: 2, kind: output, shape index: {}]
  %s3 = sld [smem:[#allocation0]]
  $region18: #{nano_region_embedder.3} parent=0
    _
  %s5 = ssub.s32 1, %s3
  %s6 = scalar_select 0, %s5, %s3
  // Predicated region
  $region2: #{nano_region_embedder.3} parent=0 // pred_check
    _
  $region3: #{nano_region_embedder.3} parent=0 // pred_check_branch
    %8 = sbr.rel (0) target = $region5
  $region4: #{nano_region_embedder.3} parent=0 // pred_region
    _
  $region5: #{nano_region_embedder.3} parent=0 // pred_fallthru
    _
  // Predicated region
  $region6: #{nano_region_embedder.3} parent=0 // pred_check
    _
  $region7: #{nano_region_embedder.3} parent=0 // pred_check_branch
    %10 = sbr.rel (0) target = $region9
  $region8: #{nano_region_embedder.3} parent=0 // pred_region
    _
  $region9: #{nano_region_embedder.3} parent=0 // pred_fallthru
    _
  %v11 = vld [vmem:[%s0] sm:$0xff]
  %v12 = vcvt.s32.f32 %v11
  %13 = vxpose.xlu0.b32.start [1/16] %v12, 128
  %14 = vxpose.xlu0.b32.cont [2/16] 0.0, 128
  %15 = vxpose.xlu0.b32.cont [3/16] 0.0, 128
  %16 = vxpose.xlu0.b32.cont [4/16] 0.0, 128
  %17 = vxpose.xlu0.b32.cont [5/16] 0.0, 128
  %18 = vxpose.xlu0.b32.cont [6/16] 0.0, 128
  %19 = vxpose.xlu0.b32.cont [7/16] 0.0, 128
  %20 = vxpose.xlu0.b32.cont [8/16] 0.0, 128
  %21 = vxpose.xlu0.b32.cont [9/16] 0.0, 128
  %22 = vxpose.xlu0.b32.cont [10/16] 0.0, 128
  %23 = vxpose.xlu0.b32.cont [11/16] 0.0, 128
  %24 = vxpose.xlu0.b32.cont [12/16] 0.0, 128
  %25 = vxpose.xlu0.b32.cont [13/16] 0.0, 128
  %26 = vxpose.xlu0.b32.cont [14/16] 0.0, 128
  %27 = vxpose.xlu0.b32.cont [15/16] 0.0, 128
  %28 = vxpose.xlu0.b32.end [16/16] 0.0, 128
  %v29 = vpop.trf.xlu0
  %v30 = vpop.trf.xlu0
  %v31 = vpop.trf.xlu0
  %v32 = vpop.trf.xlu0
  %v33 = vpop.trf.xlu0
  %v34 = vpop.trf.xlu0
  %v35 = vpop.trf.xlu0
  %v36 = vpop.trf.xlu0
  %v37 = vpop.trf.xlu0
  %v38 = vpop.trf.xlu0
  %v39 = vpop.trf.xlu0
  %v40 = vpop.trf.xlu0
  %v41 = vpop.trf.xlu0
  %v42 = vpop.trf.xlu0
  %v43 = vpop.trf.xlu0
  %v44 = vpop.trf.xlu0
  %v45 = vlaneseq
  %v46 = vand.u32 %v45, 127
  %v47 = vcvt.s32.f32 %v46
  %49 = vset.pattern.permute.xlu0 0
  %50 = vperm.xlu0 %49, %v29
  %v51 = vpop.permute.xlu0 %50
  %vm53 = vcmp.eq.f32.partialorder %v47, %v51
  %54 = vset.pattern.permute.xlu0 1
  %55 = vperm.xlu0 %54, %v29
  %v56 = vpop.permute.xlu0 %55
  %vm58 = vcmp.eq.f32.partialorder %v47, %v56
  %vm59 = vmor %vm53, %vm58
  %v60 = vsel %vm59, 1, 0
  %v61 = vcvt.s32.f32 %v60
  %v62 = vld [vmem:[%s1] sm:$0xff]
  %v63 = vld [vmem:[%s1 + $0x8] sm:$0xff]
  %v64 = vld [vmem:[%s1 + $0x10] sm:$0xff]
  %v65 = vld [vmem:[%s1 + $0x18] sm:$0xff]
  %vm66 = vcmask 261120
  %v68 = vsel %vm66, %v61, 0
  %70 = vmatprep.subr.mxu0 0.0
  %71 = vmatpush1.msra.mxu0 0.0
  %72 = vmatprep.subr.mxu0 0.0
  %73 = vmatpush1.msra.mxu0 0.0
  %74 = vmatprep.subr.mxu0 0.0
  %75 = vmatpush1.msra.mxu0 0.0
  %76 = vmatprep.subr.mxu0 0.0
  %77 = vmatpush1.msra.mxu0 0.0
  %78 = vmatprep.subr.mxu0 0.0
  %79 = vmatpush1.msra.mxu0 0.0
  %80 = vmatprep.subr.mxu0 0.0
  %81 = vmatpush1.msra.mxu0 0.0
  %82 = vmatprep.subr.mxu0 0.0
  %83 = vmatpush1.msra.mxu0 0.0
  %84 = vmatprep.subr.mxu0 0.0
  %85 = vmatpush1.msra.mxu0 0.0
  %86 = vmatprep.subr.mxu0 0.0
  %87 = vmatpush1.msra.mxu0 0.0
  %88 = vmatprep.subr.mxu0 0.0
  %89 = vmatpush1.msra.mxu0 0.0
  %90 = vmatprep.subr.mxu0 0.0
  %91 = vmatpush1.msra.mxu0 0.0
  %92 = vmatprep.subr.mxu0 0.0
  %93 = vmatpush1.msra.mxu0 0.0
  %94 = vmatprep.subr.mxu0 0.0
  %95 = vmatpush1.msra.mxu0 %v65
  %96 = vmatprep.subr.mxu0 0.0
  %97 = vmatpush1.msra.mxu0 %v64
  %98 = vmatprep.subr.mxu0 0.0
  %99 = vmatpush1.msra.mxu0 %v63
  %100 = vmatprep.subr.mxu0 0.0
  %101 = vmatpush1.msra.mxu0 %v62
  %102 = vmatprep.subr.mxu0 0.0
  %103 = vmatpush2.msra.mxu0 0.0
  %104 = vmatprep.subr.mxu0 0.0
  %105 = vmatpush2.msra.mxu0 0.0
  %106 = vmatprep.subr.mxu0 0.0
  %107 = vmatpush2.msra.mxu0 0.0
  %108 = vmatprep.subr.mxu0 0.0
  %109 = vmatpush2.msra.mxu0 0.0
  %110 = vmatprep.subr.mxu0 0.0
  %111 = vmatpush2.msra.mxu0 0.0
  %112 = vmatprep.subr.mxu0 0.0
  %113 = vmatpush2.msra.mxu0 0.0
  %114 = vmatprep.subr.mxu0 0.0
  %115 = vmatpush2.msra.mxu0 0.0
  %116 = vmatprep.subr.mxu0 0.0
  %117 = vmatpush2.msra.mxu0 0.0
  %118 = vmatprep.subr.mxu0 0.0
  %119 = vmatpush2.msra.mxu0 0.0
  %120 = vmatprep.subr.mxu0 0.0
  %121 = vmatpush2.msra.mxu0 0.0
  %122 = vmatprep.subr.mxu0 0.0
  %123 = vmatpush2.msra.mxu0 0.0
  %124 = vmatprep.subr.mxu0 0.0
  %125 = vmatpush2.msra.mxu0 0.0
  %126 = vmatprep.subr.mxu0 0.0
  %127 = vmatpush2.msra.mxu0 0.0
  %128 = vmatprep.subr.mxu0 0.0
  %129 = vmatpush2.msra.mxu0 0.0
  %130 = vmatprep.subr.mxu0 0.0
  %131 = vmatpush2.msra.mxu0 0.0
  %132 = vmatprep.subr.mxu0 0.0
  %133 = vmatpush2.msra.mxu0 0.0
  %134 = vmatprep.mubr.f32.mxu0 0.0
  %135 = vmatmul.mubr.f32.gmra.mxu0 %v68
  %v136 = vpop.f32.mrf.mxu0
  %v137 = vadd.f32 0.0, %v136
  %v138 = vpop.f32.mrf.mxu0
  %139 = vdwg.mxu0
  %140 = vst [vmem:[%s2] sm:$0xff] %v137
  // Predicated region
  $region10: #{nano_region_embedder.3} parent=0 // pred_check
    _
  $region11: #{nano_region_embedder.3} parent=0 // pred_check_branch
    %142 = sbr.rel (0) target = $region13
  $region12: #{nano_region_embedder.3} parent=0 // pred_region
    _
  $region13: #{nano_region_embedder.3} parent=0 // pred_fallthru
    _
  // Predicated region
  $region14: #{nano_region_embedder.3} parent=0 // pred_check
    _
  $region15: #{nano_region_embedder.3} parent=0 // pred_check_branch
    %144 = sbr.rel (0) target = $region17
  $region16: #{nano_region_embedder.3} parent=0 // pred_region
    _
  $region17: #{nano_region_embedder.3} parent=0 // pred_fallthru
    _

// kernel: nano_region_embedder.2
$region0: #{nano_region_embedder.2}
  #allocation0 [shape = 'u32[]', space=smem, size = 0x4, offset = 0x4, fixed_abs, tag = 'smem constant byte address 0x4 - core index']
  #allocation1 [shape = 'u32[144,128]{1,0:T(1,128)}', space=vmem, size = 0x12000, scoped, tag = 'internal scratch']
  %s0 = inlined_call_operand.vmem [shape: f32[16,32], index: 0, kind: input, shape index: {}]
  %s1 = inlined_call_operand.vmem [shape: f32[5,64], index: 1, kind: input, shape index: {}]
  %s2 = inlined_call_operand.vmem [shape: f32[32,64], index: 2, kind: input, shape index: {}]
  %s3 = inlined_call_operand.vmem [shape: f32[32,128], index: 3, kind: output, shape index: {}]
  %s4 = sld [smem:[#allocation0]]
  $region22: #{nano_region_embedder.2} parent=0
    _
  %s6 = ssub.s32 1, %s4
  %s7 = scalar_select 0, %s6, %s4
  // Predicated region
  $region2: #{nano_region_embedder.2} parent=0 // pred_check
    _
  $region3: #{nano_region_embedder.2} parent=0 // pred_check_branch
    %9 = sbr.rel (0) target = $region5
  $region4: #{nano_region_embedder.2} parent=0 // pred_region
    _
  $region5: #{nano_region_embedder.2} parent=0 // pred_fallthru
    _
  // Predicated region
  $region6: #{nano_region_embedder.2} parent=0 // pred_check
    _
  $region7: #{nano_region_embedder.2} parent=0 // pred_check_branch
    %11 = sbr.rel (0) target = $region9
  $region8: #{nano_region_embedder.2} parent=0 // pred_region
    _
  $region9: #{nano_region_embedder.2} parent=0 // pred_fallthru
    _
  // Predicated region
  $region10: #{nano_region_embedder.2} parent=0 // pred_check
    _
  $region11: #{nano_region_embedder.2} parent=0 // pred_check_branch
    %13 = sbr.rel (0) target = $region13
  $region12: #{nano_region_embedder.2} parent=0 // pred_region
    _
  $region13: #{nano_region_embedder.2} parent=0 // pred_fallthru
    _
  %v14 = vld [vmem:[%s0] sm:$0xff]
  %v15 = vld [vmem:[%s0 + $0x8] sm:$0xff]
  %v16 = vld [vmem:[%s1] sm:$0x1]
  %v17 = vld [vmem:[%s1 + $0x1] sm:$0x1]
  %v18 = vld [vmem:[%s1 + $0x2] sm:$0x1]
  %v19 = vld [vmem:[%s1 + $0x3] sm:$0x1]
  %v20 = vld [vmem:[%s1 + $0x4] sm:$0x1]
  %vm21 = vcmask 261120
  %v22 = vsel %vm21, %v14, 0.0
  %23 = vadd.xlane.f32.xlu0 %v22
  %v24 = vpop.xlane.xlu0 %23
  %v25 = vsel %vm21, %v15, 0.0
  %26 = vadd.xlane.f32.xlu0 %v25
  %v27 = vpop.xlane.xlu0 %26
  %v28 = vrcp.pop 32.0
  %v29 = vmul.f32 %v24, %v28
  %v30 = vmul.f32 %v27, %v28
  %v31 = vsub.f32 %v14, %v29
  %v32 = vsub.f32 %v15, %v30
  %v33 = vmul.f32 %v31, %v31
  %v34 = vmul.f32 %v32, %v32
  %v35 = vsel %vm21, %v33, 0.0
  %36 = vadd.xlane.f32.xlu0 %v35
  %v37 = vpop.xlane.xlu0 %36
  %v38 = vsel %vm21, %v34, 0.0
  %39 = vadd.xlane.f32.xlu0 %v38
  %v40 = vpop.xlane.xlu0 %39
  %v41 = vmul.f32 %v37, %v28
  %v42 = vmul.f32 %v40, %v28
  %v43 = vadd.f32 %v41, 1e-05
  %v44 = vadd.f32 %v42, 1e-05
  %v45 = vrsqrt.pop %v43
  %v46 = vrsqrt.pop %v44
  %v47 = vmul.f32 %v31, %v45
  %v48 = vmul.f32 %v32, %v46
  %v49 = vlaneseq
  %v50 = vshrl.u32 %v49, 7
  %v51 = vsub.s32 0, %v50
  %v52 = vrot.slane %v16, %v51
  %v53 = vmul.f32 %v47, %v52
  %v54 = vmul.f32 %v48, %v52
  %v55 = vlaneseq
  %v56 = vshrl.u32 %v55, 7
  %v57 = vsub.s32 0, %v56
  %v58 = vrot.slane %v17, %v57
  %v59 = vadd.f32 %v53, %v58
  %v60 = vadd.f32 %v54, %v58
  %v61 = vmax.f32 %v59, 0.0
  %v62 = vmax.f32 %v60, 0.0
  %v63 = vld [vmem:[%s2] sm:$0xff]
  %v64 = vld [vmem:[%s2 + $0x8] sm:$0xff]
  %v65 = vld [vmem:[%s2 + $0x10] sm:$0xff]
  %v66 = vld [vmem:[%s2 + $0x18] sm:$0xff]
  %v67 = vlaneseq
  %v68 = vshrl.u32 %v67, 7
  %v69 = vsub.s32 0, %v68
  %v70 = vrot.slane %v18, %v69
  %v72 = vsel %vm21, %v61, 0
  %v75 = vsel %vm21, %v62, 0
  %77 = vmatprep.subr.mxu0 0.0
  %78 = vmatpush1.msra.mxu0 0.0
  %79 = vmatprep.subr.mxu0 0.0
  %80 = vmatpush1.msra.mxu0 0.0
  %81 = vmatprep.subr.mxu0 0.0
  %82 = vmatpush1.msra.mxu0 0.0
  %83 = vmatprep.subr.mxu0 0.0
  %84 = vmatpush1.msra.mxu0 0.0
  %85 = vmatprep.subr.mxu0 0.0
  %86 = vmatpush1.msra.mxu0 0.0
  %87 = vmatprep.subr.mxu0 0.0
  %88 = vmatpush1.msra.mxu0 0.0
  %89 = vmatprep.subr.mxu0 0.0
  %90 = vmatpush1.msra.mxu0 0.0
  %91 = vmatprep.subr.mxu0 0.0
  %92 = vmatpush1.msra.mxu0 0.0
  %93 = vmatprep.subr.mxu0 0.0
  %94 = vmatpush1.msra.mxu0 0.0
  %95 = vmatprep.subr.mxu0 0.0
  %96 = vmatpush1.msra.mxu0 0.0
  %97 = vmatprep.subr.mxu0 0.0
  %98 = vmatpush1.msra.mxu0 0.0
  %99 = vmatprep.subr.mxu0 0.0
  %100 = vmatpush1.msra.mxu0 0.0
  %101 = vmatprep.subr.mxu0 0.0
  %102 = vmatpush1.msra.mxu0 %v66
  %103 = vmatprep.subr.mxu0 0.0
  %104 = vmatpush1.msra.mxu0 %v65
  %105 = vmatprep.subr.mxu0 0.0
  %106 = vmatpush1.msra.mxu0 %v64
  %107 = vmatprep.subr.mxu0 0.0
  %108 = vmatpush1.msra.mxu0 %v63
  %109 = vmatprep.subr.mxu0 0.0
  %110 = vmatpush2.msra.mxu0 0.0
  %111 = vmatprep.subr.mxu0 0.0
  %112 = vmatpush2.msra.mxu0 0.0
  %113 = vmatprep.subr.mxu0 0.0
  %114 = vmatpush2.msra.mxu0 0.0
  %115 = vmatprep.subr.mxu0 0.0
  %116 = vmatpush2.msra.mxu0 0.0
  %117 = vmatprep.subr.mxu0 0.0
  %118 = vmatpush2.msra.mxu0 0.0
  %119 = vmatprep.subr.mxu0 0.0
  %120 = vmatpush2.msra.mxu0 0.0
  %121 = vmatprep.subr.mxu0 0.0
  %122 = vmatpush2.msra.mxu0 0.0
  %123 = vmatprep.subr.mxu0 0.0
  %124 = vmatpush2.msra.mxu0 0.0
  %125 = vmatprep.subr.mxu0 0.0
  %126 = vmatpush2.msra.mxu0 0.0
  %127 = vmatprep.subr.mxu0 0.0
  %128 = vmatpush2.msra.mxu0 0.0
  %129 = vmatprep.subr.mxu0 0.0
  %130 = vmatpush2.msra.mxu0 0.0
  %131 = vmatprep.subr.mxu0 0.0
  %132 = vmatpush2.msra.mxu0 0.0
  %133 = vmatprep.subr.mxu0 0.0
  %134 = vmatpush2.msra.mxu0 0.0
  %135 = vmatprep.subr.mxu0 0.0
  %136 = vmatpush2.msra.mxu0 0.0
  %137 = vmatprep.subr.mxu0 0.0
  %138 = vmatpush2.msra.mxu0 0.0
  %139 = vmatprep.subr.mxu0 0.0
  %140 = vmatpush2.msra.mxu0 0.0
  %141 = vmatprep.mubr.f32.mxu0 0.0
  %142 = vmatmul.mubr.f32.gmra.mxu0 %v72
  %v143 = vpop.f32.mrf.mxu0
  %v144 = vadd.f32 %v70, %v143
  %v145 = vpop.f32.mrf.mxu0
  %146 = vmatprep.mubr.f32.mxu0 0.0
  %147 = vmatmul.mubr.f32.gmra.mxu0 %v75
  %v148 = vpop.f32.mrf.mxu0
  %v149 = vadd.f32 %v70, %v148
  %v150 = vpop.f32.mrf.mxu0
  %151 = vdwg.mxu0
  %vm152 = vcmask 523264
  %v153 = vsel %vm152, %v144, 0.0
  %154 = vadd.xlane.f32.xlu0 %v153
  %v155 = vpop.xlane.xlu0 %154
  %v156 = vsel %vm152, %v149, 0.0
  %157 = vadd.xlane.f32.xlu0 %v156
  %v158 = vpop.xlane.xlu0 %157
  %v159 = vrcp.pop 64.0
  %v160 = vmul.f32 %v155, %v159
  %v161 = vmul.f32 %v158, %v159
  %v162 = vsub.f32 %v144, %v160
  %v163 = vsub.f32 %v149, %v161
  %v164 = vmul.f32 %v162, %v162
  %v165 = vmul.f32 %v163, %v163
  %v166 = vsel %vm152, %v164, 0.0
  %167 = vadd.xlane.f32.xlu0 %v166
  %v168 = vpop.xlane.xlu0 %167
  %v169 = vsel %vm152, %v165, 0.0
  %170 = vadd.xlane.f32.xlu0 %v169
  %v171 = vpop.xlane.xlu0 %170
  %v172 = vmul.f32 %v168, %v159
  %v173 = vmul.f32 %v171, %v159
  %v174 = vadd.f32 %v172, 1e-05
  %v175 = vadd.f32 %v173, 1e-05
  %v176 = vrsqrt.pop %v174
  %v177 = vrsqrt.pop %v175
  %v178 = vmul.f32 %v162, %v176
  %v179 = vmul.f32 %v163, %v177
  %v180 = vlaneseq
  %v181 = vshrl.u32 %v180, 7
  %v182 = vsub.s32 0, %v181
  %v183 = vrot.slane %v19, %v182
  %v184 = vmul.f32 %v178, %v183
  %v185 = vmul.f32 %v179, %v183
  %v186 = vlaneseq
  %v187 = vshrl.u32 %v186, 7
  %v188 = vsub.s32 0, %v187
  %v189 = vrot.slane %v20, %v188
  %v190 = vadd.f32 %v184, %v189
  %v191 = vadd.f32 %v185, %v189
  %v192 = vmax.f32 %v190, 0.0
  %v193 = vmax.f32 %v191, 0.0
  %194 = vst [vmem:[%s3] sm:$0xff] 0.0
  %195 = vst [vmem:[%s3 + $0x8] sm:$0xff] 0.0
  %196 = vst [vmem:[%s3 + $0x10] sm:$0xff] 0.0
  %197 = vst [vmem:[%s3 + $0x18] sm:$0xff] 0.0
  %198 = vst.msk [vmem:[%s3] sm:$0xff] %vm152, %v192
  %199 = vst.msk [vmem:[%s3 + $0x8] sm:$0xff] %vm152, %v193
  %202 = vrot.lane.b32.xlu0 %v192, 64
  %v203 = vpop.permute.xlu0 %202
  %204 = vrot.lane.b32.xlu0 %v193, 64
  %v205 = vpop.permute.xlu0 %204
  %vm208 = vcmask 1048064
  %209 = vst.msk [vmem:[%s3 + $0x10] sm:$0xff] %vm208, %v203
  %210 = vst.msk [vmem:[%s3 + $0x18] sm:$0xff] %vm208, %v205
  // Predicated region
  $region14: #{nano_region_embedder.2} parent=0 // pred_check
    _
  $region15: #{nano_region_embedder.2} parent=0 // pred_check_branch
    %212 = sbr.rel (0) target = $region17
  $region16: #{nano_region_embedder.2} parent=0 // pred_region
    _
  $region17: #{nano_region_embedder.2} parent=0 // pred_fallthru
    _
  // Predicated region
  $region18: #{nano_region_embedder.2} parent=0 // pred_check
    _
  $region19: #{nano_region_embedder.2} parent=0 // pred_check_branch
    %214 = sbr.rel (0) target = $region21
  $region20: #{nano_region_embedder.2} parent=0 // pred_region
    _
  $region21: #{nano_region_embedder.2} parent=0 // pred_fallthru
    _

</llo_original>
